<compile_context>
chip_gen: v5e
topology: v5e:2x2
jax: 0.10.0
libtpu: 0.0.40
codegen_flags: <defaults>
</compile_context>

<pallas_src>
import math

import jax
import jax.numpy as jnp
from jax.experimental import pallas as pl
from jax.experimental.pallas import tpu as pltpu

NOISE = -2.0   # ActorNet.noise default
LANE = 128     # TPU lane width; every layer's output is padded to this


def _round_up(x, m):
    return (x + m - 1) // m * m


def actor_net_kernel(x_ref, w1_ref, b1_ref, w2_ref, b2_ref, w3_ref, b3_ref,
                     mu_ref):
    """One (TB, .) batch tile: three fused matmuls + activations, lane-dense out."""
    x = x_ref[...]                                                 # (TB, NI) bf16

    # Layer 0: Linear + ReLU (bf16 operands, f32 accumulate/activation).
    h = jnp.dot(x, w1_ref[...], preferred_element_type=jnp.float32)
    h = jnp.maximum(h + b1_ref[...], 0.0).astype(jnp.bfloat16)

    # Layer 1: Linear + ReLU.
    h = jnp.dot(h, w2_ref[...], preferred_element_type=jnp.float32)
    h = jnp.maximum(h + b2_ref[...], 0.0).astype(jnp.bfloat16)

    # Output head: Linear + softsign, stored as a full 128-lane tile (unmasked vst).
    z = jnp.dot(h, w3_ref[...], preferred_element_type=jnp.float32) + b3_ref[...]
    mu_ref[...] = (z / (1.0 + jnp.abs(z))).astype(mu_ref.dtype)


def actor_net_forward(x, params, *, tb=256):
    """x: [B, num_inputs] f32.  Returns (mu [B, num_outputs] f32, log_std)."""
    B, num_inputs = x.shape
    num_outputs = params["num_outputs"]
    w1, b1 = params["w1"], params["b1"]
    w2, b2 = params["w2"], params["b2"]
    w3, b3 = params["w3"], params["b3"]

    # Batch tile: multiple of 16 (bf16 sublane tile); pad batch up to a multiple.
    TB = min(tb, _round_up(B, 16))
    Bp = _round_up(B, TB)
    if Bp != B:
        x = jnp.pad(x, ((0, Bp - B), (0, 0)))
    x = x.astype(jnp.bfloat16)

    grid = (Bp // TB,)
    const = lambda i: (0, 0)   # weights/biases: constant block -> stay VMEM-resident

    mu_padded = pl.pallas_call(
        actor_net_kernel,
        out_shape=jax.ShapeDtypeStruct((Bp, LANE), jnp.float32),
        grid=grid,
        in_specs=[
            pl.BlockSpec((TB, num_inputs), lambda i: (i, 0)),   # x: batch-tiled
            pl.BlockSpec(w1.shape, const),
            pl.BlockSpec(b1.shape, const),
            pl.BlockSpec(w2.shape, const),
            pl.BlockSpec(b2.shape, const),
            pl.BlockSpec(w3.shape, const),
            pl.BlockSpec(b3.shape, const),
        ],
        out_specs=pl.BlockSpec((TB, LANE), lambda i: (i, 0)),
        compiler_params=pltpu.CompilerParams(
            dimension_semantics=("parallel",)),
    )(x, w1, b1, w2, b2, w3, b3)

    mu = mu_padded[:B, :num_outputs]
    # log_std is a compile-time constant; produce it outside the kernel.
    log_std = jnp.full((B, num_outputs), NOISE, dtype=jnp.float32)
    return mu, log_std


def init_actor_params(key, num_inputs, num_outputs, hidden_layer=(64, 64)):
    """PyTorch-style Linear init: U(-1/sqrt(fan_in), +1/sqrt(fan_in)).

    Weights are stored pre-transposed ([in, out]), zero-padded to 128 output
    lanes, and cast to bf16 (MXU operands).  Biases are f32 [1, 128].
    """
    assert all(h <= LANE for h in hidden_layer)
    dims = [num_inputs, hidden_layer[0], hidden_layer[1], num_outputs]
    in_dims_padded = [num_inputs, LANE, LANE]   # input widths the kernel sees
    params = {"num_outputs": num_outputs}
    for idx, (fi, fo) in enumerate(zip(dims[:-1], dims[1:]), start=1):
        key, kw, kb = jax.random.split(key, 3)
        bound = 1.0 / math.sqrt(fi)
        w = jax.random.uniform(kw, (fi, fo), jnp.float32,
                               minval=-bound, maxval=bound)
        b = jax.random.uniform(kb, (fo,), jnp.float32,
                               minval=-bound, maxval=bound)
        fi_p = in_dims_padded[idx - 1]
        w_p = jnp.zeros((fi_p, LANE), jnp.float32).at[:fi, :fo].set(w)
        b_p = jnp.zeros((1, LANE), jnp.float32).at[0, :fo].set(b)
        params[f"w{idx}"] = w_p.astype(jnp.bfloat16)
        params[f"b{idx}"] = b_p
    return params


def reference_forward(x, params):
    """Pure-JAX reference mirroring the kernel's bf16-operand / f32-accumulate math."""
    num_outputs = params["num_outputs"]
    f32 = lambda a: a.astype(jnp.float32)
    xb = f32(x.astype(jnp.bfloat16))
    h = jnp.maximum(xb @ f32(params["w1"]) + params["b1"], 0.0)
    h = f32(h.astype(jnp.bfloat16))
    h = jnp.maximum(h @ f32(params["w2"]) + params["b2"], 0.0)
    h = f32(h.astype(jnp.bfloat16))
    z = h @ f32(params["w3"]) + params["b3"]
    mu = (z / (1.0 + jnp.abs(z)))[:, :num_outputs]
    log_std = jnp.full_like(mu, NOISE)
    return mu, log_std


if __name__ == "__main__":
    # Small shapes consistent with the module: batch=2, num_inputs=32,
    # hidden=[64, 64], num_outputs=8.
    B, NUM_INPUTS, NUM_OUTPUTS = 2, 32, 8

    key = jax.random.PRNGKey(0)
    key, kx = jax.random.split(key)
    params = init_actor_params(key, NUM_INPUTS, NUM_OUTPUTS)
    x = jax.random.normal(kx, (B, NUM_INPUTS), jnp.float32)

    mu, log_std = actor_net_forward(x, params)
    jax.block_until_ready((mu, log_std))

    mu_ref, log_std_ref = reference_forward(x, params)
    assert mu.shape == (B, NUM_OUTPUTS) and log_std.shape == (B, NUM_OUTPUTS)
    assert jnp.allclose(mu, mu_ref, atol=1e-4, rtol=1e-4)
    assert jnp.allclose(log_std, log_std_ref)

    # Also exercise the batched grid path (multiple steps + partial last tile).
    B2 = 40
    x2 = jax.random.normal(jax.random.PRNGKey(1), (B2, NUM_INPUTS), jnp.float32)
    mu2, _ = actor_net_forward(x2, params, tb=16)
    jax.block_until_ready(mu2)
    mu2_ref, _ = reference_forward(x2, params)
    assert mu2.shape == (B2, NUM_OUTPUTS)
    assert jnp.allclose(mu2, mu2_ref, atol=1e-4, rtol=1e-4)

    print("KERNEL_OK")
</pallas_src>

<mosaic_0001>
module attributes {stable_mosaic.version = 11 : i64} {
  func.func @actor_net_kernel(%arg0: i32, %arg1: memref<16x32xbf16, #tpu.memory_space<vmem>>, %arg2: memref<32x128xbf16, #tpu.memory_space<vmem>>, %arg3: memref<1x128xf32, #tpu.memory_space<vmem>>, %arg4: memref<128x128xbf16, #tpu.memory_space<vmem>>, %arg5: memref<1x128xf32, #tpu.memory_space<vmem>>, %arg6: memref<128x128xbf16, #tpu.memory_space<vmem>>, %arg7: memref<1x128xf32, #tpu.memory_space<vmem>>, %arg8: memref<16x128xf32, #tpu.memory_space<vmem>>) attributes {dimension_semantics = [#tpu.dimension_semantics<parallel>], iteration_bounds = array<i64: 1>, scalar_prefetch = 0 : i64, scratch_operands = 0 : i64, tpu.core_type = #tpu.core_type<tc>, window_params = [{transform_indices = @transform_0, window_bounds = array<i64: 16, 32>}, {pipeline_mode = #tpu.pipeline_mode<synchronous>, transform_indices = @transform_1, window_bounds = array<i64: 32, 128>}, {pipeline_mode = #tpu.pipeline_mode<synchronous>, transform_indices = @transform_2, window_bounds = array<i64: 1, 128>}, {pipeline_mode = #tpu.pipeline_mode<synchronous>, transform_indices = @transform_3, window_bounds = array<i64: 128, 128>}, {pipeline_mode = #tpu.pipeline_mode<synchronous>, transform_indices = @transform_4, window_bounds = array<i64: 1, 128>}, {pipeline_mode = #tpu.pipeline_mode<synchronous>, transform_indices = @transform_5, window_bounds = array<i64: 128, 128>}, {pipeline_mode = #tpu.pipeline_mode<synchronous>, transform_indices = @transform_6, window_bounds = array<i64: 1, 128>}, {transform_indices = @transform_7, window_bounds = array<i64: 16, 128>}]} {
    %c0 = arith.constant 0 : index
    %c0_0 = arith.constant 0 : index
    %0 = vector.load %arg1[%c0, %c0_0] : memref<16x32xbf16, #tpu.memory_space<vmem>>, vector<16x32xbf16>
    %c0_1 = arith.constant 0 : index
    %c0_2 = arith.constant 0 : index
    %1 = vector.load %arg2[%c0_1, %c0_2] : memref<32x128xbf16, #tpu.memory_space<vmem>>, vector<32x128xbf16>
    %cst = arith.constant dense<0.000000e+00> : vector<16x128xf32>
    %2 = tpu.matmul %0, %1, %cst {dimension_numbers = #tpu.dot_dimension_numbers<[1], [0], [0], [1], [0, 0, 1, 1], [], []>} : vector<16x32xbf16>, vector<32x128xbf16>, vector<16x128xf32> -> vector<16x128xf32>
    %c0_3 = arith.constant 0 : index
    %c0_4 = arith.constant 0 : index
    %3 = vector.load %arg3[%c0_3, %c0_4] : memref<1x128xf32, #tpu.memory_space<vmem>>, vector<1x128xf32>
    %4 = vector.broadcast %3 : vector<1x128xf32> to vector<16x128xf32>
    %5 = arith.addf %2, %4 : vector<16x128xf32>
    %cst_5 = arith.constant 0.000000e+00 : f32
    %6 = vector.broadcast %cst_5 : f32 to vector<16x128xf32>
    %7 = arith.maximumf %5, %6 : vector<16x128xf32>
    %8 = arith.truncf %7 : vector<16x128xf32> to vector<16x128xbf16>
    %c0_6 = arith.constant 0 : index
    %c0_7 = arith.constant 0 : index
    %9 = vector.load %arg4[%c0_6, %c0_7] : memref<128x128xbf16, #tpu.memory_space<vmem>>, vector<128x128xbf16>
    %cst_8 = arith.constant dense<0.000000e+00> : vector<16x128xf32>
    %10 = tpu.matmul %8, %9, %cst_8 {dimension_numbers = #tpu.dot_dimension_numbers<[1], [0], [0], [1], [0, 0, 1, 1], [], []>} : vector<16x128xbf16>, vector<128x128xbf16>, vector<16x128xf32> -> vector<16x128xf32>
    %c0_9 = arith.constant 0 : index
    %c0_10 = arith.constant 0 : index
    %11 = vector.load %arg5[%c0_9, %c0_10] : memref<1x128xf32, #tpu.memory_space<vmem>>, vector<1x128xf32>
    %12 = vector.broadcast %11 : vector<1x128xf32> to vector<16x128xf32>
    %13 = arith.addf %10, %12 : vector<16x128xf32>
    %cst_11 = arith.constant 0.000000e+00 : f32
    %14 = vector.broadcast %cst_11 : f32 to vector<16x128xf32>
    %15 = arith.maximumf %13, %14 : vector<16x128xf32>
    %16 = arith.truncf %15 : vector<16x128xf32> to vector<16x128xbf16>
    %c0_12 = arith.constant 0 : index
    %c0_13 = arith.constant 0 : index
    %17 = vector.load %arg6[%c0_12, %c0_13] : memref<128x128xbf16, #tpu.memory_space<vmem>>, vector<128x128xbf16>
    %cst_14 = arith.constant dense<0.000000e+00> : vector<16x128xf32>
    %18 = tpu.matmul %16, %17, %cst_14 {dimension_numbers = #tpu.dot_dimension_numbers<[1], [0], [0], [1], [0, 0, 1, 1], [], []>} : vector<16x128xbf16>, vector<128x128xbf16>, vector<16x128xf32> -> vector<16x128xf32>
    %c0_15 = arith.constant 0 : index
    %c0_16 = arith.constant 0 : index
    %19 = vector.load %arg7[%c0_15, %c0_16] : memref<1x128xf32, #tpu.memory_space<vmem>>, vector<1x128xf32>
    %20 = vector.broadcast %19 : vector<1x128xf32> to vector<16x128xf32>
    %21 = arith.addf %18, %20 : vector<16x128xf32>
    %22 = math.absf %21 : vector<16x128xf32>
    %cst_17 = arith.constant 1.000000e+00 : f32
    %23 = vector.broadcast %cst_17 : f32 to vector<16x128xf32>
    %24 = arith.addf %23, %22 : vector<16x128xf32>
    %25 = arith.divf %21, %24 : vector<16x128xf32>
    %c0_18 = arith.constant 0 : index
    %c0_19 = arith.constant 0 : index
    %26 = vector.load %arg8[%c0_18, %c0_19] : memref<16x128xf32, #tpu.memory_space<vmem>>, vector<16x128xf32>
    tpu.vector_store %arg8[%c0_18, %c0_19], %25 {strides = array<i32>} : memref<16x128xf32, #tpu.memory_space<vmem>>, vector<16x128xf32>,
    return
  }
  func.func @transform_0(%arg0: i32) -> (i32, i32) {
    %c0_i32 = arith.constant 0 : i32
    %c0_i32_0 = arith.constant 0 : i32
    return %arg0, %c0_i32 : i32, i32
  }
  func.func @transform_1(%arg0: i32) -> (i32, i32) {
    %c0_i32 = arith.constant 0 : i32
    %c0_i32_0 = arith.constant 0 : i32
    %c0_i32_1 = arith.constant 0 : i32
    return %c0_i32, %c0_i32_0 : i32, i32
  }
  func.func @transform_2(%arg0: i32) -> (i32, i32) {
    %c0_i32 = arith.constant 0 : i32
    %c0_i32_0 = arith.constant 0 : i32
    %c0_i32_1 = arith.constant 0 : i32
    return %c0_i32, %c0_i32_0 : i32, i32
  }
  func.func @transform_3(%arg0: i32) -> (i32, i32) {
    %c0_i32 = arith.constant 0 : i32
    %c0_i32_0 = arith.constant 0 : i32
    %c0_i32_1 = arith.constant 0 : i32
    return %c0_i32, %c0_i32_0 : i32, i32
  }
  func.func @transform_4(%arg0: i32) -> (i32, i32) {
    %c0_i32 = arith.constant 0 : i32
    %c0_i32_0 = arith.constant 0 : i32
    %c0_i32_1 = arith.constant 0 : i32
    return %c0_i32, %c0_i32_0 : i32, i32
  }
  func.func @transform_5(%arg0: i32) -> (i32, i32) {
    %c0_i32 = arith.constant 0 : i32
    %c0_i32_0 = arith.constant 0 : i32
    %c0_i32_1 = arith.constant 0 : i32
    return %c0_i32, %c0_i32_0 : i32, i32
  }
  func.func @transform_6(%arg0: i32) -> (i32, i32) {
    %c0_i32 = arith.constant 0 : i32
    %c0_i32_0 = arith.constant 0 : i32
    %c0_i32_1 = arith.constant 0 : i32
    return %c0_i32, %c0_i32_0 : i32, i32
  }
  func.func @transform_7(%arg0: i32) -> (i32, i32) {
    %c0_i32 = arith.constant 0 : i32
    %c0_i32_0 = arith.constant 0 : i32
    return %arg0, %c0_i32 : i32, i32
  }
}

</mosaic_0001>

<llo_original>
// kernel: tpu_custom_call.1
$region0: #{tpu_custom_call.1}
  #allocation0 [shape = 'u32[]', space=smem, size = 0x4, offset = 0x4, fixed_abs, tag = 'smem constant byte address 0x4 - core index']
  #allocation1 [shape = 'u32[72,128]{1,0:T(1,128)}', space=vmem, size = 0x9000, scoped, tag = 'internal scratch']
  %s0 = inlined_call_operand.hbm [shape: bf16[16,32], index: 0, kind: input, shape index: {}]
  %s1 = inlined_call_operand.hbm [shape: bf16[32,128], index: 1, kind: input, shape index: {}]
  %s2 = inlined_call_operand.vmem [shape: f32[1,128], index: 2, kind: input, shape index: {}]
  %s3 = inlined_call_operand.hbm [shape: bf16[128,128], index: 3, kind: input, shape index: {}]
  %s4 = inlined_call_operand.vmem [shape: f32[1,128], index: 4, kind: input, shape index: {}]
  %s5 = inlined_call_operand.hbm [shape: bf16[128,128], index: 5, kind: input, shape index: {}]
  %s6 = inlined_call_operand.vmem [shape: f32[1,128], index: 6, kind: input, shape index: {}]
  %s7 = inlined_call_operand.hbm [shape: f32[16,128], index: 7, kind: output, shape index: {}]
  %s8 = sld [smem:[#allocation0]]
  $region54: #{tpu_custom_call.1} parent=0
    _
  %s10 = ssub.s32 1, %s8
  %s11 = scalar_select 0, %s10, %s8
  $region1: #{tpu_custom_call.1} parent=0
    #allocation2 [shape = 'u8[4096]{0}', space=vmem, size = 0x1000, scoped, tag = 'input window, operand 0, single buffered']
    #allocation3 [shape = 's32[1]{0}', space=sflag, size = 0x4, scoped, tag = 'scoped memory for tpu_custom_call.1']
    #allocation4 [shape = 's32[1]{0}', space=sflag, size = 0x4, scoped, tag = 'scoped memory for tpu_custom_call.1']
    #allocation5 [shape = 'u8[8192]{0}', space=vmem, size = 0x2000, scoped, tag = 'input window, operand 1, single buffered']
    #allocation6 [shape = 's32[1]{0}', space=sflag, size = 0x4, scoped, tag = 'scoped memory for tpu_custom_call.1']
    #allocation7 [shape = 'u8[32768]{0}', space=vmem, size = 0x8000, scoped, tag = 'input window, operand 3, single buffered']
    #allocation8 [shape = 'u8[32768]{0}', space=vmem, size = 0x8000, scoped, tag = 'input window, operand 5, single buffered']
    #allocation9 [shape = 's32[1]{0}', space=sflag, size = 0x4, scoped, tag = 'scoped memory for tpu_custom_call.1']
    #allocation10 [shape = 'u8[8192]{0}', space=vmem, size = 0x2000, scoped, tag = 'output window, operand 0, single buffered']
    %12 = vsyncpa [#allocation3], 0
    %13 = vsyncpa [#allocation6], 0
    %14 = vsyncpa [#allocation9], 0
    %15 = vsyncpa [#allocation4], 0
    // Predicated region
    $region2: #{tpu_custom_call.1} parent=1 // pred_check
      _
    $region3: #{tpu_custom_call.1} parent=1 // pred_check_branch
      %17 = sbr.rel (0) target = $region5
    $region4: #{tpu_custom_call.1} parent=1 // pred_region
      %19 = vsyncadd [#allocation3], 0
      %s20 = sshll.u32 %s0, 4
      %s21 = int_to_ptr.hbm [resolvable:$true] %s20
      %s22 = sshll.u32 [#allocation2], 4
      %s23 = int_to_ptr.vmem [resolvable:$true] %s22
      %28 = dma.hbm_to_vmem [thread:$0]  %s21, 128, %s23, [#allocation3], 64, 64, 4
    $region5: #{tpu_custom_call.1} parent=1 // pred_fallthru
      _
    // Predicated region
    $region6: #{tpu_custom_call.1} parent=1 // pred_check
      _
    $region7: #{tpu_custom_call.1} parent=1 // pred_check_branch
      %30 = sbr.rel (0) target = $region9
    $region8: #{tpu_custom_call.1} parent=1 // pred_region
      %32 = vsyncadd [#allocation6], 0
      %s33 = sshll.u32 %s1, 4
      %s34 = int_to_ptr.hbm [resolvable:$true] %s33
      %s35 = sshll.u32 [#allocation5], 4
      %s36 = int_to_ptr.vmem [resolvable:$true] %s35
      %41 = dma.hbm_to_vmem [thread:$0]  %s34, 256, %s36, [#allocation6], 64, 64, 4
    $region9: #{tpu_custom_call.1} parent=1 // pred_fallthru
      _
    // Predicated region
    $region10: #{tpu_custom_call.1} parent=1 // pred_check
      _
    $region11: #{tpu_custom_call.1} parent=1 // pred_check_branch
      %43 = sbr.rel (0) target = $region13
    $region12: #{tpu_custom_call.1} parent=1 // pred_region
      _
    $region13: #{tpu_custom_call.1} parent=1 // pred_fallthru
      _
    // Predicated region
    $region14: #{tpu_custom_call.1} parent=1 // pred_check
      _
    $region15: #{tpu_custom_call.1} parent=1 // pred_check_branch
      %45 = sbr.rel (0) target = $region17
    $region16: #{tpu_custom_call.1} parent=1 // pred_region
      %47 = vsyncadd [#allocation6], 0
      %s48 = sshll.u32 %s3, 4
      %s49 = int_to_ptr.hbm [resolvable:$true] %s48
      %s50 = sshll.u32 [#allocation7], 4
      %s51 = int_to_ptr.vmem [resolvable:$true] %s50
      %56 = dma.hbm_to_vmem [thread:$0]  %s49, 1024, %s51, [#allocation6], 64, 64, 4
    $region17: #{tpu_custom_call.1} parent=1 // pred_fallthru
      _
    // Predicated region
    $region18: #{tpu_custom_call.1} parent=1 // pred_check
      _
    $region19: #{tpu_custom_call.1} parent=1 // pred_check_branch
      %58 = sbr.rel (0) target = $region21
    $region20: #{tpu_custom_call.1} parent=1 // pred_region
      _
    $region21: #{tpu_custom_call.1} parent=1 // pred_fallthru
      _
    // Predicated region
    $region22: #{tpu_custom_call.1} parent=1 // pred_check
      _
    $region23: #{tpu_custom_call.1} parent=1 // pred_check_branch
      %60 = sbr.rel (0) target = $region25
    $region24: #{tpu_custom_call.1} parent=1 // pred_region
      %62 = vsyncadd [#allocation9], 0
      %s63 = sshll.u32 %s5, 4
      %s64 = int_to_ptr.hbm [resolvable:$true] %s63
      %s65 = sshll.u32 [#allocation8], 4
      %s66 = int_to_ptr.vmem [resolvable:$true] %s65
      %71 = dma.hbm_to_vmem [thread:$0]  %s64, 1024, %s66, [#allocation9], 64, 64, 4
    $region25: #{tpu_custom_call.1} parent=1 // pred_fallthru
      _
    // Predicated region
    $region26: #{tpu_custom_call.1} parent=1 // pred_check
      _
    $region27: #{tpu_custom_call.1} parent=1 // pred_check_branch
      %73 = sbr.rel (0) target = $region29
    $region28: #{tpu_custom_call.1} parent=1 // pred_region
      _
    $region29: #{tpu_custom_call.1} parent=1 // pred_fallthru
      _
    // Predicated region
    $region30: #{tpu_custom_call.1} parent=1 // pred_check
      _
    $region31: #{tpu_custom_call.1} parent=1 // pred_check_branch
      %75 = sbr.rel (0) target = $region33
    $region32: #{tpu_custom_call.1} parent=1 // pred_region
      %77 = dma.done [#allocation3], 128
    $region33: #{tpu_custom_call.1} parent=1 // pred_fallthru
      _
    // Predicated region
    $region34: #{tpu_custom_call.1} parent=1 // pred_check
      _
    $region35: #{tpu_custom_call.1} parent=1 // pred_check_branch
      %79 = sbr.rel (0) target = $region37
    $region36: #{tpu_custom_call.1} parent=1 // pred_region
      %81 = dma.done [#allocation6], 256
    $region37: #{tpu_custom_call.1} parent=1 // pred_fallthru
      _
    // Predicated region
    $region38: #{tpu_custom_call.1} parent=1 // pred_check
      _
    $region39: #{tpu_custom_call.1} parent=1 // pred_check_branch
      %83 = sbr.rel (0) target = $region41
    $region40: #{tpu_custom_call.1} parent=1 // pred_region
      %85 = dma.done [#allocation6], 1024
    $region41: #{tpu_custom_call.1} parent=1 // pred_fallthru
      _
    // Predicated region
    $region42: #{tpu_custom_call.1} parent=1 // pred_check
      _
    $region43: #{tpu_custom_call.1} parent=1 // pred_check_branch
      %87 = sbr.rel (0) target = $region45
    $region44: #{tpu_custom_call.1} parent=1 // pred_region
      %89 = dma.done [#allocation9], 1024
    $region45: #{tpu_custom_call.1} parent=1 // pred_fallthru
      _
    %v91 = vld [vmem:[#allocation2] sm:$0xf]
    %v92 = vld [vmem:[#allocation2 + $0x4] sm:$0xf]
    %v93 = vld [vmem:[#allocation5] sm:$0xf]
    %v94 = vld [vmem:[#allocation5 + $0x4] sm:$0xf]
    %v95 = vld [vmem:[#allocation5 + $0x8] sm:$0xf]
    %v96 = vld [vmem:[#allocation5 + $0xc] sm:$0xf]
    %v97 = vld [vmem:[%s2] sm:$0x1]
    %v99 = vperm.slane %v97, 0
    %v103 = vunpack.c.l.b16 %v91
    %v104 = vunpack.c.l.b16 %v92
    %v105 = vpack.c.b16 %v104, %v103
    %v110 = vunpack.c.l.b16 %v93
    %v111 = vunpack.c.l.b16 %v94
    %v112 = vunpack.c.l.b16 %v95
    %v113 = vunpack.c.l.b16 %v96
    %v114 = vpack.c.b16 %v111, %v110
    %v115 = vpack.c.b16 %v113, %v112
    %vm118 = vcmask 261120
    %v120 = vsel %vm118, %v105, 0
    %122 = vmatpush.bf16.msra.mxu0 0
    %123 = vmatpush.bf16.msra.mxu0 0
    %124 = vmatpush.bf16.msra.mxu0 0
    %125 = vmatpush.bf16.msra.mxu0 0
    %126 = vmatpush.bf16.msra.mxu0 0
    %127 = vmatpush.bf16.msra.mxu0 0
    %128 = vmatpush.bf16.msra.mxu0 %v115
    %129 = vmatpush.bf16.msra.mxu0 %v114
    %130 = vmatmul.bf16.gmra.mxu0 %v120
    %v131 = vpop.f32.mrf.mxu0
    %v132 = vadd.f32 %v99, %v131
    %v133 = vpop.f32.mrf.mxu0
    %v134 = vadd.f32 %v99, %v133
    %135 = vdwg.mxu0
    %v136 = vmax.f32 %v132, 0.0
    %v137 = vmax.f32 %v134, 0.0
    %v138 = vpack.c.bf16 %v137, %v136
    %v139 = vld [vmem:[#allocation7] sm:$0xf]
    %v140 = vld [vmem:[#allocation7 + $0x4] sm:$0xf]
    %v141 = vld [vmem:[#allocation7 + $0x8] sm:$0xf]
    %v142 = vld [vmem:[#allocation7 + $0xc] sm:$0xf]
    %v143 = vld [vmem:[#allocation7 + $0x10] sm:$0xf]
    %v144 = vld [vmem:[#allocation7 + $0x14] sm:$0xf]
    %v145 = vld [vmem:[#allocation7 + $0x18] sm:$0xf]
    %v146 = vld [vmem:[#allocation7 + $0x1c] sm:$0xf]
    %v147 = vld [vmem:[#allocation7 + $0x20] sm:$0xf]
    %v148 = vld [vmem:[#allocation7 + $0x24] sm:$0xf]
    %v149 = vld [vmem:[#allocation7 + $0x28] sm:$0xf]
    %v150 = vld [vmem:[#allocation7 + $0x2c] sm:$0xf]
    %v151 = vld [vmem:[#allocation7 + $0x30] sm:$0xf]
    %v152 = vld [vmem:[#allocation7 + $0x34] sm:$0xf]
    %v153 = vld [vmem:[#allocation7 + $0x38] sm:$0xf]
    %v154 = vld [vmem:[#allocation7 + $0x3c] sm:$0xf]
    %v155 = vld [vmem:[%s4] sm:$0x1]
    %v157 = vperm.slane %v155, 0
    %v175 = vunpack.c.l.b16 %v139
    %v176 = vunpack.c.l.b16 %v140
    %v177 = vunpack.c.l.b16 %v141
    %v178 = vunpack.c.l.b16 %v142
    %v179 = vunpack.c.l.b16 %v143
    %v180 = vunpack.c.l.b16 %v144
    %v181 = vunpack.c.l.b16 %v145
    %v182 = vunpack.c.l.b16 %v146
    %v183 = vunpack.c.l.b16 %v147
    %v184 = vunpack.c.l.b16 %v148
    %v185 = vunpack.c.l.b16 %v149
    %v186 = vunpack.c.l.b16 %v150
    %v187 = vunpack.c.l.b16 %v151
    %v188 = vunpack.c.l.b16 %v152
    %v189 = vunpack.c.l.b16 %v153
    %v190 = vunpack.c.l.b16 %v154
    %v191 = vpack.c.b16 %v176, %v175
    %v192 = vpack.c.b16 %v178, %v177
    %v193 = vpack.c.b16 %v180, %v179
    %v194 = vpack.c.b16 %v182, %v181
    %v195 = vpack.c.b16 %v184, %v183
    %v196 = vpack.c.b16 %v186, %v185
    %v197 = vpack.c.b16 %v188, %v187
    %v198 = vpack.c.b16 %v190, %v189
    %207 = vmatpush.bf16.msra.mxu0 %v198
    %208 = vmatpush.bf16.msra.mxu0 %v197
    %209 = vmatpush.bf16.msra.mxu0 %v196
    %210 = vmatpush.bf16.msra.mxu0 %v195
    %211 = vmatpush.bf16.msra.mxu0 %v194
    %212 = vmatpush.bf16.msra.mxu0 %v193
    %213 = vmatpush.bf16.msra.mxu0 %v192
    %214 = vmatpush.bf16.msra.mxu0 %v191
    %215 = vmatmul.bf16.gmra.mxu0 %v138
    %v216 = vpop.f32.mrf.mxu0
    %v217 = vadd.f32 %v157, %v216
    %v218 = vpop.f32.mrf.mxu0
    %v219 = vadd.f32 %v157, %v218
    %220 = vdwg.mxu0
    %v221 = vmax.f32 %v217, 0.0
    %v222 = vmax.f32 %v219, 0.0
    %v223 = vpack.c.bf16 %v222, %v221
    %v224 = vld [vmem:[#allocation8] sm:$0xf]
    %v225 = vld [vmem:[#allocation8 + $0x4] sm:$0xf]
    %v226 = vld [vmem:[#allocation8 + $0x8] sm:$0xf]
    %v227 = vld [vmem:[#allocation8 + $0xc] sm:$0xf]
    %v228 = vld [vmem:[#allocation8 + $0x10] sm:$0xf]
    %v229 = vld [vmem:[#allocation8 + $0x14] sm:$0xf]
    %v230 = vld [vmem:[#allocation8 + $0x18] sm:$0xf]
    %v231 = vld [vmem:[#allocation8 + $0x1c] sm:$0xf]
    %v232 = vld [vmem:[#allocation8 + $0x20] sm:$0xf]
    %v233 = vld [vmem:[#allocation8 + $0x24] sm:$0xf]
    %v234 = vld [vmem:[#allocation8 + $0x28] sm:$0xf]
    %v235 = vld [vmem:[#allocation8 + $0x2c] sm:$0xf]
    %v236 = vld [vmem:[#allocation8 + $0x30] sm:$0xf]
    %v237 = vld [vmem:[#allocation8 + $0x34] sm:$0xf]
    %v238 = vld [vmem:[#allocation8 + $0x38] sm:$0xf]
    %v239 = vld [vmem:[#allocation8 + $0x3c] sm:$0xf]
    %v240 = vld [vmem:[%s6] sm:$0x1]
    %v242 = vperm.slane %v240, 0
    %v260 = vunpack.c.l.b16 %v224
    %v261 = vunpack.c.l.b16 %v225
    %v262 = vunpack.c.l.b16 %v226
    %v263 = vunpack.c.l.b16 %v227
    %v264 = vunpack.c.l.b16 %v228
    %v265 = vunpack.c.l.b16 %v229
    %v266 = vunpack.c.l.b16 %v230
    %v267 = vunpack.c.l.b16 %v231
    %v268 = vunpack.c.l.b16 %v232
    %v269 = vunpack.c.l.b16 %v233
    %v270 = vunpack.c.l.b16 %v234
    %v271 = vunpack.c.l.b16 %v235
    %v272 = vunpack.c.l.b16 %v236
    %v273 = vunpack.c.l.b16 %v237
    %v274 = vunpack.c.l.b16 %v238
    %v275 = vunpack.c.l.b16 %v239
    %v276 = vpack.c.b16 %v261, %v260
    %v277 = vpack.c.b16 %v263, %v262
    %v278 = vpack.c.b16 %v265, %v264
    %v279 = vpack.c.b16 %v267, %v266
    %v280 = vpack.c.b16 %v269, %v268
    %v281 = vpack.c.b16 %v271, %v270
    %v282 = vpack.c.b16 %v273, %v272
    %v283 = vpack.c.b16 %v275, %v274
    %292 = vmatpush.bf16.msra.mxu0 %v283
    %293 = vmatpush.bf16.msra.mxu0 %v282
    %294 = vmatpush.bf16.msra.mxu0 %v281
    %295 = vmatpush.bf16.msra.mxu0 %v280
    %296 = vmatpush.bf16.msra.mxu0 %v279
    %297 = vmatpush.bf16.msra.mxu0 %v278
    %298 = vmatpush.bf16.msra.mxu0 %v277
    %299 = vmatpush.bf16.msra.mxu0 %v276
    %300 = vmatmul.bf16.gmra.mxu0 %v223
    %v301 = vpop.f32.mrf.mxu0
    %v302 = vadd.f32 %v242, %v301
    %v303 = vpop.f32.mrf.mxu0
    %v304 = vadd.f32 %v242, %v303
    %305 = vdwg.mxu0
    %v306 = vand.u32 2147483647, %v302
    %v307 = vand.u32 2147483647, %v304
    %v308 = vadd.f32 %v306, 1.0
    %v309 = vadd.f32 %v307, 1.0
    %v310 = vrcp.pop %v308
    %v311 = vmul.f32 %v308, %v310
    %v312 = vsub.f32 1.0, %v311
    %v313 = vmul.f32 %v310, %v312
    %v314 = vadd.f32 %v310, %v313
    %vm315 = vweird.f32 %v308
    %vm316 = vweird.f32 %v310
    %vm317 = vmor %vm315, %vm316
    %v318 = vsel %vm317, %v310, %v314
    %v319 = vand.u32 2147483647, %v308
    %vm320 = vcmp.eq.f32.partialorder %v319, 8.507059e+37
    %v321 = vand.u32 %v308, 2147483648
    %v322 = vor.u32 1.1754944e-38, %v321
    %v323 = vsel %vm320, %v322, %v318
    %v324 = vmul.f32 %v302, %v323
    %v325 = vrcp.pop %v309
    %v326 = vmul.f32 %v309, %v325
    %v327 = vsub.f32 1.0, %v326
    %v328 = vmul.f32 %v325, %v327
    %v329 = vadd.f32 %v325, %v328
    %vm330 = vweird.f32 %v309
    %vm331 = vweird.f32 %v325
    %vm332 = vmor %vm330, %vm331
    %v333 = vsel %vm332, %v325, %v329
    %v334 = vand.u32 2147483647, %v309
    %vm335 = vcmp.eq.f32.partialorder %v334, 8.507059e+37
    %v336 = vand.u32 %v309, 2147483648
    %v337 = vor.u32 1.1754944e-38, %v336
    %v338 = vsel %vm335, %v337, %v333
    %v339 = vmul.f32 %v304, %v338
    %340 = vst [vmem:[#allocation10] sm:$0xff] %v324
    %341 = vst [vmem:[#allocation10 + $0x8] sm:$0xff] %v339
    // Predicated region
    $region46: #{tpu_custom_call.1} parent=1 // pred_check
      _
    $region47: #{tpu_custom_call.1} parent=1 // pred_check_branch
      %343 = sbr.rel (0) target = $region49
    $region48: #{tpu_custom_call.1} parent=1 // pred_region
      %345 = vsyncadd [#allocation4], 0
      %s346 = sshll.u32 [#allocation10], 4
      %s347 = int_to_ptr.vmem [resolvable:$true] %s346
      %s348 = sshll.u32 %s7, 4
      %s349 = int_to_ptr.hbm [resolvable:$true] %s348
      %354 = dma.vmem_to_hbm [thread:$0]  %s347, 256, %s349, [#allocation4], 128, 128, 8
    $region49: #{tpu_custom_call.1} parent=1 // pred_fallthru
      _
    // Predicated region
    $region50: #{tpu_custom_call.1} parent=1 // pred_check
      _
    $region51: #{tpu_custom_call.1} parent=1 // pred_check_branch
      %356 = sbr.rel (0) target = $region53
    $region52: #{tpu_custom_call.1} parent=1 // pred_region
      %358 = dma.done [#allocation4], 256
    $region53: #{tpu_custom_call.1} parent=1 // pred_fallthru
      _
    %359 = vsyncpa [#allocation3], 1
    %360 = vsyncpa [#allocation6], 1
    %361 = vsyncpa [#allocation9], 1
    %362 = vsyncpa [#allocation4], 1

</llo_original>
